<compile_context>
chip_gen: v5e
topology: v5e:2x2
jax: 0.10.0
libtpu: 0.0.40
codegen_flags: <defaults>
</compile_context>

<pallas_src>
import jax
import jax.numpy as jnp
from jax.experimental import pallas as pl
from jax.experimental.pallas import tpu as pltpu

_LANE = 128
_SUBLANE = 8


def _round_up(x, m):
    return ((x + m - 1) // m) * m


def film_kernel(emb_ref, w_ref, b_ref, out_ref):
    """One fused projection: out = emb @ W_cat + b_cat.

    emb_ref: [TILE_B, D_in]      VMEM (tiled over batch)
    w_ref:   [D_in, 2*D_out]     VMEM (resident across grid steps)
    b_ref:   [1, 2*D_out]        VMEM (resident, broadcasts over rows)
    out_ref: [TILE_B, 2*D_out]   VMEM (lane-dense store)
    """
    # fp32 inputs: use HIGHEST so the MXU doesn't take the bf16 multi-pass
    # shortcut (closer to fp32 nn.Linear).  bf16 inputs: default precision.
    precision = (jax.lax.Precision.HIGHEST
                 if emb_ref.dtype == jnp.float32 else None)
    acc = jnp.dot(emb_ref[...], w_ref[...],
                  preferred_element_type=jnp.float32, precision=precision)
    # Bias add stays f32 before the final cast (v5e VPU has no bf16).
    out_ref[...] = (acc + b_ref[...].astype(jnp.float32)).astype(out_ref.dtype)


def prepare_film_params(w_gamma, b_gamma, w_beta, b_beta, dtype=None):
    """Module-init-time parameter prep (run ONCE, not per forward).

    PyTorch-shaped inputs: weights [D_out, D_in], biases [D_out].
    Returns W_cat [D_in, 2*D_out] and b_cat [1, 2*D_out] with gamma in the
    first D_out lanes and beta in the last D_out lanes.
    Pass dtype=jnp.bfloat16 to halve weight/IO bytes (mem-bound kernel).
    """
    w_cat = jnp.concatenate([w_gamma.T, w_beta.T], axis=1)
    b_cat = jnp.concatenate([b_gamma, b_beta], axis=0).reshape(1, -1)
    if dtype is not None:
        w_cat = w_cat.astype(dtype)
        b_cat = b_cat.astype(dtype)
    return w_cat, b_cat


def _pick_tile_b(B, d_in, two_d_out, itemsize,
                 vmem_budget_bytes=16 << 20, max_tile_b=16384):
    """Largest batch tile whose double-buffered, LANE-PADDED in/out blocks
    fit the VMEM budget (the [tb, d_in] block is padded to 128 lanes)."""
    d_in_pad = _round_up(d_in, _LANE)
    d_out_pad = _round_up(two_d_out, _LANE)
    per_row = 2 * (d_in_pad + d_out_pad) * itemsize    # x2 = double buffering
    tb = max(_SUBLANE, vmem_budget_bytes // per_row)   # 8192 fp32 / 16384 bf16
    tb = min(tb, max_tile_b)
    if B <= tb:
        return B                                       # single full-array block
    tb = (tb // _SUBLANE) * _SUBLANE
    # Prefer an EVEN number of grid steps so v7x's two TensorCores get equal
    # work from the "parallel" batch axis (harmless no-op on v5e/v6e).
    steps = -(-B // tb)
    if steps > 1 and steps % 2 == 1:
        alt_tb = _round_up(-(-B // (steps + 1)), _SUBLANE)
        if alt_tb >= _SUBLANE and (-(-B // alt_tb)) % 2 == 0:
            tb = alt_tb
    return tb


def _vmem_limit_bytes(tb, d_in, two_d_out, itemsize, w_itemsize, b_itemsize):
    """Explicit scoped-VMEM limit from the real padded, double-buffered
    footprint (+ headroom), capped at 32 MiB (valid on v5e/v6e/v7x)."""
    d_in_pad = _round_up(d_in, _LANE)
    d_out_pad = _round_up(two_d_out, _LANE)
    io_bytes = 2 * tb * (d_in_pad + d_out_pad) * itemsize     # double-buffered
    w_bytes = 2 * _round_up(d_in, _SUBLANE) * d_out_pad * w_itemsize
    b_bytes = 2 * _SUBLANE * d_out_pad * b_itemsize
    limit = io_bytes + w_bytes + b_bytes + (4 << 20)          # scratch headroom
    return int(min(max(limit, 8 << 20), 32 << 20))


def film_forward_fused(embedding, w_cat, b_cat, *, tile_b=None,
                       min_pallas_batch=512, force_pallas=False):
    """Returns the fused [B, 2*D_out] projection, lanes = [gamma | beta].

    Preferred production entry point: returning the lane-dense slab avoids a
    standalone scale/shift slice pass that would re-read the result from HBM.
    """
    B, d_in = embedding.shape
    two_d_out = w_cat.shape[1]
    out_dtype = embedding.dtype

    # Tiny batches: the Pallas call is pure launch + pipeline-prologue cost;
    # a plain XLA matmul is strictly cheaper and fuses with neighbours.
    if not force_pallas and B < min_pallas_batch:
        acc = jnp.dot(embedding, w_cat, preferred_element_type=jnp.float32)
        return (acc + b_cat.astype(jnp.float32)).astype(out_dtype)

    itemsize = jnp.dtype(out_dtype).itemsize
    if tile_b is None:
        tb = _pick_tile_b(B, d_in, two_d_out, itemsize)
    else:
        tb = min(int(tile_b), B)
        if B > tb:
            tb = max(_SUBLANE, (tb // _SUBLANE) * _SUBLANE)
    grid = (pl.cdiv(B, tb),)

    # Per-array byte accounting (stays correct if params move to bf16).
    bytes_accessed = (embedding.size * embedding.dtype.itemsize
                      + w_cat.size * w_cat.dtype.itemsize
                      + b_cat.size * b_cat.dtype.itemsize
                      + B * two_d_out * itemsize)
    cost = pl.CostEstimate(flops=2 * B * d_in * two_d_out,
                           transcendentals=0,
                           bytes_accessed=int(bytes_accessed))

    vmem_limit = _vmem_limit_bytes(tb, d_in, two_d_out, itemsize,
                                   w_cat.dtype.itemsize, b_cat.dtype.itemsize)

    return pl.pallas_call(
        film_kernel,
        out_shape=jax.ShapeDtypeStruct((B, two_d_out), out_dtype),
        grid_spec=pltpu.PrefetchScalarGridSpec(
            num_scalar_prefetch=0,
            grid=grid,
            in_specs=[
                # embedding: tiled along batch.
                pl.BlockSpec((tb, d_in), lambda i: (i, 0)),
                # fused weight + bias: constant index_map -> VMEM-resident.
                # (pipeline_mode=pl.Buffered(1) would drop their unused 2nd
                #  buffer, ~20 KiB; skipped for portability across versions.)
                pl.BlockSpec((d_in, two_d_out), lambda i: (0, 0)),
                pl.BlockSpec((1, two_d_out), lambda i: (0, 0)),
            ],
            out_specs=pl.BlockSpec((tb, two_d_out), lambda i: (i, 0)),
        ),
        compiler_params=pltpu.CompilerParams(
            dimension_semantics=("parallel",),
            vmem_limit_bytes=vmem_limit,
        ),
        cost_estimate=cost,
    )(embedding, w_cat, b_cat)


def film_forward(embedding, w_cat, b_cat, d_out, **kwargs):
    """PyTorch-module-compatible API: returns (scale, shift).

    NOTE: the two slices below are standalone XLA ops that re-read the fused
    result from HBM; in a real model prefer film_forward_fused and fuse
    x * scale + shift into the consumer kernel.
    """
    fused = film_forward_fused(embedding, w_cat, b_cat, **kwargs)
    return fused[:, :d_out], fused[:, d_out:]


if __name__ == "__main__":
    # Small shapes consistent with the module: batch=2, input_dim=32, output_dim=64.
    B, D_IN, D_OUT = 2, 32, 64

    key = jax.random.PRNGKey(0)
    k_emb, k_wg, k_bg, k_wb, k_bb, k_emb2 = jax.random.split(key, 6)

    embedding = jax.random.normal(k_emb, (B, D_IN), dtype=jnp.float32)
    # PyTorch-shaped parameters: Linear weight is [out, in], bias [out].
    w_gamma = jax.random.normal(k_wg, (D_OUT, D_IN), dtype=jnp.float32) * 0.1
    b_gamma = jax.random.normal(k_bg, (D_OUT,), dtype=jnp.float32) * 0.1
    w_beta = jax.random.normal(k_wb, (D_OUT, D_IN), dtype=jnp.float32) * 0.1
    b_beta = jax.random.normal(k_bb, (D_OUT,), dtype=jnp.float32) * 0.1

    # "Module init": transpose + concat once (fp32 here to match nn.Linear).
    w_cat, b_cat = prepare_film_params(w_gamma, b_gamma, w_beta, b_beta)

    # 1) Module-equivalent forward at the demo shape, forced through the
    #    Pallas kernel (default dispatch would route B=2 to plain XLA).
    scale, shift = film_forward(embedding, w_cat, b_cat, D_OUT,
                                force_pallas=True)
    jax.block_until_ready((scale, shift))

    scale_ref = embedding @ w_gamma.T + b_gamma
    shift_ref = embedding @ w_beta.T + b_beta
    assert scale.shape == (B, D_OUT) and shift.shape == (B, D_OUT)
    assert jnp.allclose(scale, scale_ref, atol=1e-5, rtol=1e-5)
    assert jnp.allclose(shift, shift_ref, atol=1e-5, rtol=1e-5)

    # 2) Partial-last-tile coverage: B not a multiple of the batch tile.
    B2 = 300
    emb2 = jax.random.normal(k_emb2, (B2, D_IN), dtype=jnp.float32)
    fused2 = film_forward_fused(emb2, w_cat, b_cat, tile_b=128,
                                force_pallas=True)
    jax.block_until_ready(fused2)
    fused2_ref = emb2 @ w_cat + b_cat
    assert fused2.shape == (B2, 2 * D_OUT)
    assert jnp.allclose(fused2, fused2_ref, atol=1e-5, rtol=1e-5)

    print("KERNEL_OK")
</pallas_src>

<mosaic_0001>
module attributes {stable_mosaic.version = 11 : i64} {
  func.func @film_kernel(%arg0: i32, %arg1: memref<2x32xf32, #tpu.memory_space<vmem>>, %arg2: memref<32x128xf32, #tpu.memory_space<vmem>>, %arg3: memref<1x128xf32, #tpu.memory_space<vmem>>, %arg4: memref<2x128xf32, #tpu.memory_space<vmem>>) attributes {dimension_semantics = [#tpu.dimension_semantics<parallel>], iteration_bounds = array<i64: 1>, scalar_prefetch = 0 : i64, scratch_operands = 0 : i64, tpu.core_type = #tpu.core_type<tc>, window_params = [{transform_indices = @transform_0, window_bounds = array<i64: 2, 32>}, {pipeline_mode = #tpu.pipeline_mode<synchronous>, transform_indices = @transform_1, window_bounds = array<i64: 32, 128>}, {pipeline_mode = #tpu.pipeline_mode<synchronous>, transform_indices = @transform_2, window_bounds = array<i64: 1, 128>}, {transform_indices = @transform_3, window_bounds = array<i64: 2, 128>}]} {
    %c0 = arith.constant 0 : index
    %c0_0 = arith.constant 0 : index
    %0 = vector.load %arg1[%c0, %c0_0] : memref<2x32xf32, #tpu.memory_space<vmem>>, vector<2x32xf32>
    %c0_1 = arith.constant 0 : index
    %c0_2 = arith.constant 0 : index
    %1 = vector.load %arg2[%c0_1, %c0_2] : memref<32x128xf32, #tpu.memory_space<vmem>>, vector<32x128xf32>
    %cst = arith.constant dense<0.000000e+00> : vector<2x128xf32>
    %2 = tpu.matmul %0, %1, %cst {dimension_numbers = #tpu.dot_dimension_numbers<[1], [0], [0], [1], [0, 0, 1, 1], [], []>, precision = #tpu.contract_precision<fp32>} : vector<2x32xf32>, vector<32x128xf32>, vector<2x128xf32> -> vector<2x128xf32>
    %c0_3 = arith.constant 0 : index
    %c0_4 = arith.constant 0 : index
    %3 = vector.load %arg3[%c0_3, %c0_4] : memref<1x128xf32, #tpu.memory_space<vmem>>, vector<1x128xf32>
    %4 = vector.broadcast %3 : vector<1x128xf32> to vector<2x128xf32>
    %5 = arith.addf %2, %4 : vector<2x128xf32>
    %c0_5 = arith.constant 0 : index
    %c0_6 = arith.constant 0 : index
    %6 = vector.load %arg4[%c0_5, %c0_6] : memref<2x128xf32, #tpu.memory_space<vmem>>, vector<2x128xf32>
    tpu.vector_store %arg4[%c0_5, %c0_6], %5 {strides = array<i32>} : memref<2x128xf32, #tpu.memory_space<vmem>>, vector<2x128xf32>,
    return
  }
  func.func @transform_0(%arg0: i32) -> (i32, i32) {
    %c0_i32 = arith.constant 0 : i32
    %c0_i32_0 = arith.constant 0 : i32
    return %arg0, %c0_i32 : i32, i32
  }
  func.func @transform_1(%arg0: i32) -> (i32, i32) {
    %c0_i32 = arith.constant 0 : i32
    %c0_i32_0 = arith.constant 0 : i32
    %c0_i32_1 = arith.constant 0 : i32
    return %c0_i32, %c0_i32_0 : i32, i32
  }
  func.func @transform_2(%arg0: i32) -> (i32, i32) {
    %c0_i32 = arith.constant 0 : i32
    %c0_i32_0 = arith.constant 0 : i32
    %c0_i32_1 = arith.constant 0 : i32
    return %c0_i32, %c0_i32_0 : i32, i32
  }
  func.func @transform_3(%arg0: i32) -> (i32, i32) {
    %c0_i32 = arith.constant 0 : i32
    %c0_i32_0 = arith.constant 0 : i32
    return %arg0, %c0_i32 : i32, i32
  }
}

</mosaic_0001>

<llo_original>
// kernel: tpu_custom_call.1
$region0: #{tpu_custom_call.1}
  #allocation0 [shape = 'u32[]', space=smem, size = 0x4, offset = 0x4, fixed_abs, tag = 'smem constant byte address 0x4 - core index']
  #allocation1 [shape = 'u32[72,128]{1,0:T(1,128)}', space=vmem, size = 0x9000, scoped, tag = 'internal scratch']
  %s0 = inlined_call_operand.hbm [shape: f32[2,32], index: 0, kind: input, shape index: {}]
  %s1 = inlined_call_operand.hbm [shape: f32[32,128], index: 1, kind: input, shape index: {}]
  %s2 = inlined_call_operand.vmem [shape: f32[1,128], index: 2, kind: input, shape index: {}]
  %s3 = inlined_call_operand.hbm [shape: f32[2,128], index: 3, kind: output, shape index: {}]
  %s4 = sld [smem:[#allocation0]]
  $region30: #{tpu_custom_call.1} parent=0
    _
  %s6 = ssub.s32 1, %s4
  %s7 = scalar_select 0, %s6, %s4
  $region1: #{tpu_custom_call.1} parent=0
    #allocation2 [shape = 'u8[1024]{0}', space=vmem, size = 0x400, scoped, tag = 'input window, operand 0, single buffered']
    #allocation3 [shape = 's32[1]{0}', space=sflag, size = 0x4, scoped, tag = 'scoped memory for tpu_custom_call.1']
    #allocation4 [shape = 's32[1]{0}', space=sflag, size = 0x4, scoped, tag = 'scoped memory for tpu_custom_call.1']
    #allocation5 [shape = 'u8[16384]{0}', space=vmem, size = 0x4000, scoped, tag = 'input window, operand 1, single buffered']
    #allocation6 [shape = 's32[1]{0}', space=sflag, size = 0x4, scoped, tag = 'scoped memory for tpu_custom_call.1']
    #allocation7 [shape = 'u8[1024]{0}', space=vmem, size = 0x400, scoped, tag = 'output window, operand 0, single buffered']
    %8 = vsyncpa [#allocation3], 0
    %9 = vsyncpa [#allocation6], 0
    %10 = vsyncpa [#allocation4], 0
    // Predicated region
    $region2: #{tpu_custom_call.1} parent=1 // pred_check
      _
    $region3: #{tpu_custom_call.1} parent=1 // pred_check_branch
      %12 = sbr.rel (0) target = $region5
    $region4: #{tpu_custom_call.1} parent=1 // pred_region
      %14 = vsyncadd [#allocation3], 0
      %s16 = sshll.u32 %s0, 4
      %s17 = int_to_ptr.hbm [resolvable:$true] %s16
      %s18 = sshll.u32 [#allocation2], 4
      %s19 = int_to_ptr.vmem [resolvable:$true] %s18
      %21 = dma.hbm_to_vmem [thread:$0]  %s17, 32, %s19, [#allocation3]
    $region5: #{tpu_custom_call.1} parent=1 // pred_fallthru
      _
    // Predicated region
    $region6: #{tpu_custom_call.1} parent=1 // pred_check
      _
    $region7: #{tpu_custom_call.1} parent=1 // pred_check_branch
      %23 = sbr.rel (0) target = $region9
    $region8: #{tpu_custom_call.1} parent=1 // pred_region
      %25 = vsyncadd [#allocation6], 0
      %s26 = sshll.u32 %s1, 4
      %s27 = int_to_ptr.hbm [resolvable:$true] %s26
      %s28 = sshll.u32 [#allocation5], 4
      %s29 = int_to_ptr.vmem [resolvable:$true] %s28
      %34 = dma.hbm_to_vmem [thread:$0]  %s27, 512, %s29, [#allocation6], 128, 128, 8
    $region9: #{tpu_custom_call.1} parent=1 // pred_fallthru
      _
    // Predicated region
    $region10: #{tpu_custom_call.1} parent=1 // pred_check
      _
    $region11: #{tpu_custom_call.1} parent=1 // pred_check_branch
      %36 = sbr.rel (0) target = $region13
    $region12: #{tpu_custom_call.1} parent=1 // pred_region
      _
    $region13: #{tpu_custom_call.1} parent=1 // pred_fallthru
      _
    // Predicated region
    $region14: #{tpu_custom_call.1} parent=1 // pred_check
      _
    $region15: #{tpu_custom_call.1} parent=1 // pred_check_branch
      %38 = sbr.rel (0) target = $region17
    $region16: #{tpu_custom_call.1} parent=1 // pred_region
      %40 = dma.done [#allocation3], 32
    $region17: #{tpu_custom_call.1} parent=1 // pred_fallthru
      _
    // Predicated region
    $region18: #{tpu_custom_call.1} parent=1 // pred_check
      _
    $region19: #{tpu_custom_call.1} parent=1 // pred_check_branch
      %42 = sbr.rel (0) target = $region21
    $region20: #{tpu_custom_call.1} parent=1 // pred_region
      %44 = dma.done [#allocation6], 512
    $region21: #{tpu_custom_call.1} parent=1 // pred_fallthru
      _
    %v45 = vld [vmem:[#allocation2] sm:$0x3]
    %v46 = vld [vmem:[#allocation5] sm:$0xff]
    %v47 = vld [vmem:[#allocation5 + $0x8] sm:$0xff]
    %v48 = vld [vmem:[#allocation5 + $0x10] sm:$0xff]
    %v49 = vld [vmem:[#allocation5 + $0x18] sm:$0xff]
    %v50 = vld [vmem:[%s2] sm:$0x1]
    %v52 = vperm.slane %v50, 0
    %vm54 = vcmask 261120
    %v56 = vsel %vm54, %v45, 0
    %58 = vmatpush.msra.mxu0 0.0
    %59 = vmatpush.msra.mxu0 0.0
    %60 = vmatpush.msra.mxu0 0.0
    %61 = vmatpush.msra.mxu0 0.0
    %62 = vmatpush.msra.mxu0 0.0
    %63 = vmatpush.msra.mxu0 0.0
    %64 = vmatpush.msra.mxu0 0.0
    %65 = vmatpush.msra.mxu0 0.0
    %66 = vmatpush.msra.mxu0 0.0
    %67 = vmatpush.msra.mxu0 0.0
    %68 = vmatpush.msra.mxu0 0.0
    %69 = vmatpush.msra.mxu0 0.0
    %v70 = vand.u32 %v49, 4294901760
    %71 = vmatpush.msra.mxu0 %v70
    %v72 = vand.u32 %v48, 4294901760
    %73 = vmatpush.msra.mxu0 %v72
    %v74 = vand.u32 %v47, 4294901760
    %75 = vmatpush.msra.mxu0 %v74
    %v76 = vand.u32 %v46, 4294901760
    %77 = vmatpush.msra.mxu0 %v76
    %v78 = vand.u32 %v56, 4294901760
    %v79 = vsub.f32 %v56, %v78
    %v80 = vand.u32 %v79, 4294901760
    %v81 = vsub.f32 %v79, %v80
    %v82 = vand.u32 %v81, 4294901760
    %83 = vmatmul.f32.gmra.mxu0 %v82
    %v84 = vpop.f32.mrf.mxu0
    %v85 = vadd.f32 %v52, %v84
    %86 = vdwg.mxu0
    %87 = vmatpush.msra.mxu0 0.0
    %88 = vmatpush.msra.mxu0 0.0
    %89 = vmatpush.msra.mxu0 0.0
    %90 = vmatpush.msra.mxu0 0.0
    %91 = vmatpush.msra.mxu0 0.0
    %92 = vmatpush.msra.mxu0 0.0
    %93 = vmatpush.msra.mxu0 0.0
    %94 = vmatpush.msra.mxu0 0.0
    %95 = vmatpush.msra.mxu0 0.0
    %96 = vmatpush.msra.mxu0 0.0
    %97 = vmatpush.msra.mxu0 0.0
    %98 = vmatpush.msra.mxu0 0.0
    %v99 = vand.u32 %v49, 4294901760
    %v100 = vsub.f32 %v49, %v99
    %v101 = vand.u32 %v100, 4294901760
    %v102 = vsub.f32 %v100, %v101
    %v103 = vand.u32 %v102, 4294901760
    %104 = vmatpush.msra.mxu0 %v103
    %v105 = vand.u32 %v48, 4294901760
    %v106 = vsub.f32 %v48, %v105
    %v107 = vand.u32 %v106, 4294901760
    %v108 = vsub.f32 %v106, %v107
    %v109 = vand.u32 %v108, 4294901760
    %110 = vmatpush.msra.mxu0 %v109
    %v111 = vand.u32 %v47, 4294901760
    %v112 = vsub.f32 %v47, %v111
    %v113 = vand.u32 %v112, 4294901760
    %v114 = vsub.f32 %v112, %v113
    %v115 = vand.u32 %v114, 4294901760
    %116 = vmatpush.msra.mxu0 %v115
    %v117 = vand.u32 %v46, 4294901760
    %v118 = vsub.f32 %v46, %v117
    %v119 = vand.u32 %v118, 4294901760
    %v120 = vsub.f32 %v118, %v119
    %v121 = vand.u32 %v120, 4294901760
    %122 = vmatpush.msra.mxu0 %v121
    %v123 = vand.u32 %v56, 4294901760
    %124 = vmatmul.f32.gmra.mxu0 %v123
    %v125 = vpop.f32.mrf.mxu0
    %v126 = vadd.f32 %v85, %v125
    %127 = vdwg.mxu0
    %128 = vmatpush.msra.mxu0 0.0
    %129 = vmatpush.msra.mxu0 0.0
    %130 = vmatpush.msra.mxu0 0.0
    %131 = vmatpush.msra.mxu0 0.0
    %132 = vmatpush.msra.mxu0 0.0
    %133 = vmatpush.msra.mxu0 0.0
    %134 = vmatpush.msra.mxu0 0.0
    %135 = vmatpush.msra.mxu0 0.0
    %136 = vmatpush.msra.mxu0 0.0
    %137 = vmatpush.msra.mxu0 0.0
    %138 = vmatpush.msra.mxu0 0.0
    %139 = vmatpush.msra.mxu0 0.0
    %v140 = vand.u32 %v49, 4294901760
    %v141 = vsub.f32 %v49, %v140
    %142 = vmatpush.msra.mxu0 %v141
    %v143 = vand.u32 %v48, 4294901760
    %v144 = vsub.f32 %v48, %v143
    %145 = vmatpush.msra.mxu0 %v144
    %v146 = vand.u32 %v47, 4294901760
    %v147 = vsub.f32 %v47, %v146
    %148 = vmatpush.msra.mxu0 %v147
    %v149 = vand.u32 %v46, 4294901760
    %v150 = vsub.f32 %v46, %v149
    %151 = vmatpush.msra.mxu0 %v150
    %v152 = vand.u32 %v56, 4294901760
    %v153 = vsub.f32 %v56, %v152
    %154 = vmatmul.f32.gmra.mxu0 %v153
    %v155 = vpop.f32.mrf.mxu0
    %v156 = vadd.f32 %v126, %v155
    %157 = vdwg.mxu0
    %158 = vmatpush.msra.mxu0 0.0
    %159 = vmatpush.msra.mxu0 0.0
    %160 = vmatpush.msra.mxu0 0.0
    %161 = vmatpush.msra.mxu0 0.0
    %162 = vmatpush.msra.mxu0 0.0
    %163 = vmatpush.msra.mxu0 0.0
    %164 = vmatpush.msra.mxu0 0.0
    %165 = vmatpush.msra.mxu0 0.0
    %166 = vmatpush.msra.mxu0 0.0
    %167 = vmatpush.msra.mxu0 0.0
    %168 = vmatpush.msra.mxu0 0.0
    %169 = vmatpush.msra.mxu0 0.0
    %v170 = vand.u32 %v49, 4294901760
    %171 = vmatpush.msra.mxu0 %v170
    %v172 = vand.u32 %v48, 4294901760
    %173 = vmatpush.msra.mxu0 %v172
    %v174 = vand.u32 %v47, 4294901760
    %175 = vmatpush.msra.mxu0 %v174
    %v176 = vand.u32 %v46, 4294901760
    %177 = vmatpush.msra.mxu0 %v176
    %v178 = vand.u32 %v56, 4294901760
    %v179 = vsub.f32 %v56, %v178
    %v180 = vand.u32 %v179, 4294901760
    %181 = vmatmul.f32.gmra.mxu0 %v180
    %v182 = vpop.f32.mrf.mxu0
    %v183 = vadd.f32 %v156, %v182
    %184 = vdwg.mxu0
    %185 = vmatpush.msra.mxu0 0.0
    %186 = vmatpush.msra.mxu0 0.0
    %187 = vmatpush.msra.mxu0 0.0
    %188 = vmatpush.msra.mxu0 0.0
    %189 = vmatpush.msra.mxu0 0.0
    %190 = vmatpush.msra.mxu0 0.0
    %191 = vmatpush.msra.mxu0 0.0
    %192 = vmatpush.msra.mxu0 0.0
    %193 = vmatpush.msra.mxu0 0.0
    %194 = vmatpush.msra.mxu0 0.0
    %195 = vmatpush.msra.mxu0 0.0
    %196 = vmatpush.msra.mxu0 0.0
    %v197 = vand.u32 %v49, 4294901760
    %v198 = vsub.f32 %v49, %v197
    %v199 = vand.u32 %v198, 4294901760
    %200 = vmatpush.msra.mxu0 %v199
    %v201 = vand.u32 %v48, 4294901760
    %v202 = vsub.f32 %v48, %v201
    %v203 = vand.u32 %v202, 4294901760
    %204 = vmatpush.msra.mxu0 %v203
    %v205 = vand.u32 %v47, 4294901760
    %v206 = vsub.f32 %v47, %v205
    %v207 = vand.u32 %v206, 4294901760
    %208 = vmatpush.msra.mxu0 %v207
    %v209 = vand.u32 %v46, 4294901760
    %v210 = vsub.f32 %v46, %v209
    %v211 = vand.u32 %v210, 4294901760
    %212 = vmatpush.msra.mxu0 %v211
    %v213 = vand.u32 %v56, 4294901760
    %214 = vmatmul.f32.gmra.mxu0 %v213
    %v215 = vpop.f32.mrf.mxu0
    %v216 = vadd.f32 %v183, %v215
    %217 = vdwg.mxu0
    %218 = vmatpush.msra.mxu0 0.0
    %219 = vmatpush.msra.mxu0 0.0
    %220 = vmatpush.msra.mxu0 0.0
    %221 = vmatpush.msra.mxu0 0.0
    %222 = vmatpush.msra.mxu0 0.0
    %223 = vmatpush.msra.mxu0 0.0
    %224 = vmatpush.msra.mxu0 0.0
    %225 = vmatpush.msra.mxu0 0.0
    %226 = vmatpush.msra.mxu0 0.0
    %227 = vmatpush.msra.mxu0 0.0
    %228 = vmatpush.msra.mxu0 0.0
    %229 = vmatpush.msra.mxu0 0.0
    %v230 = vand.u32 %v49, 4294901760
    %231 = vmatpush.msra.mxu0 %v230
    %v232 = vand.u32 %v48, 4294901760
    %233 = vmatpush.msra.mxu0 %v232
    %v234 = vand.u32 %v47, 4294901760
    %235 = vmatpush.msra.mxu0 %v234
    %v236 = vand.u32 %v46, 4294901760
    %237 = vmatpush.msra.mxu0 %v236
    %v238 = vand.u32 %v56, 4294901760
    %239 = vmatmul.f32.gmra.mxu0 %v238
    %v240 = vpop.f32.mrf.mxu0
    %v241 = vadd.f32 %v216, %v240
    %242 = vdwg.mxu0
    %243 = vst [vmem:[#allocation7] sm:$0x3] %v241
    // Predicated region
    $region22: #{tpu_custom_call.1} parent=1 // pred_check
      _
    $region23: #{tpu_custom_call.1} parent=1 // pred_check_branch
      %245 = sbr.rel (0) target = $region25
    $region24: #{tpu_custom_call.1} parent=1 // pred_region
      %247 = vsyncadd [#allocation4], 0
      %s249 = sshll.u32 [#allocation7], 4
      %s250 = int_to_ptr.vmem [resolvable:$true] %s249
      %s251 = sshll.u32 %s3, 4
      %s252 = int_to_ptr.hbm [resolvable:$true] %s251
      %254 = dma.vmem_to_hbm [thread:$0]  %s250, 32, %s252, [#allocation4]
    $region25: #{tpu_custom_call.1} parent=1 // pred_fallthru
      _
    // Predicated region
    $region26: #{tpu_custom_call.1} parent=1 // pred_check
      _
    $region27: #{tpu_custom_call.1} parent=1 // pred_check_branch
      %256 = sbr.rel (0) target = $region29
    $region28: #{tpu_custom_call.1} parent=1 // pred_region
      %258 = dma.done [#allocation4], 32
    $region29: #{tpu_custom_call.1} parent=1 // pred_fallthru
      _
    %259 = vsyncpa [#allocation3], 1
    %260 = vsyncpa [#allocation6], 1
    %261 = vsyncpa [#allocation4], 1

</llo_original>
